<compile_context>
chip_gen: v7x
topology: tpu7x:2x2x1
jax: 0.10.0
libtpu: 0.0.40
codegen_flags: <defaults>
</compile_context>

<pallas_src>
import jax
import jax.numpy as jnp
from jax import lax
from jax.experimental import pallas as pl
from jax.experimental.pallas import tpu as pltpu

NUM_VARS = 10          # numVars (data-derived in the original script)
NUM_HIDDEN = 32
NUM_LATENT = 16
NUM_LAYERS = 4

DIM_PAD = NUM_HIDDEN                     # 32: padded feature dim of every layer
OUT_PAD = ((NUM_VARS + 7) // 8) * 8      # 16: sublane-aligned output feature dim
MIN_TILE = 128                           # lane width
MAX_BATCH_TILE = 4096                    # per review: 2048-8192; 4096 keeps VMEM small


def _round_up(n, m):
    return ((n + m - 1) // m) * m


def _compute_dtype():
    """bf16 weights/matmuls/tanh on v6e/v7x; f32 elsewhere (v5e has no bf16 VPU/EUP)."""
    try:
        kind = jax.devices()[0].device_kind.lower()
    except Exception:
        return jnp.float32
    return jnp.bfloat16 if ("v6" in kind or "v7" in kind) else jnp.float32


def _tiles_for(batch):
    """Batch tile (multiple of 128 lanes) and padded batch; always >= 2 grid steps."""
    b_pad0 = _round_up(max(batch, 2 * MIN_TILE), 2 * MIN_TILE)
    n_tiles = max(2, -(-b_pad0 // MAX_BATCH_TILE))       # >=2 so both v7x TCs work
    tb = _round_up(-(-b_pad0 // n_tiles), MIN_TILE)
    tb = min(tb, MAX_BATCH_TILE)
    return tb, n_tiles * tb


def decoder_kernel(x_ref, w_ref, bc_ref, br_ref, out_ref):
    # x_ref  : (TB, NUM_LATENT) f32                  natural layout (batch on sublanes)
    # w_ref  : (NUM_LAYERS, DIM_PAD, DIM_PAD)        compute-dtype weight slab, (out,in);
    #                                                last layer stored TRANSPOSED (in,out)
    # bc_ref : (NUM_LAYERS-1, DIM_PAD, 1) f32        hidden-layer bias columns
    # br_ref : (1, OUT_PAD) f32                      last-layer bias row
    # out_ref: (TB, OUT_PAD) f32                     natural layout (batch on sublanes)
    cdt = w_ref.dtype
    x = x_ref[...].astype(cdt)                             # (TB, 16)

    # Layer 0: contract the latent dim of x directly (q@k.T-style feed); only the
    # 16 real latent columns of W0 are used -> no padded-feature DMA or compute.
    w0 = w_ref[0, :, :NUM_LATENT]                          # (32, 16) static slice
    h = lax.dot_general(w0, x, (((1,), (1,)), ((), ())),
                        preferred_element_type=jnp.float32)  # (32, TB) batch on lanes
    h = jnp.tanh((h + bc_ref[0]).astype(cdt))

    # Hidden layers 1..2: plain (32,32) @ (32,TB) MXU matmuls, f32 accumulation.
    for l in range(1, NUM_LAYERS - 1):
        h = jnp.dot(w_ref[l], h, preferred_element_type=jnp.float32)
        h = jnp.tanh((h + bc_ref[l]).astype(cdt))

    # Last layer: weight stored as (in, out); contracting dim 0 of both operands
    # gives the batch-major (TB, OUT_PAD) result directly (no output transpose).
    w_last = w_ref[NUM_LAYERS - 1, :, :OUT_PAD]            # (32, OUT_PAD)
    out = lax.dot_general(h, w_last, (((0,), (0,)), ((), ())),
                          preferred_element_type=jnp.float32)  # (TB, OUT_PAD)
    out_ref[...] = out + br_ref[...]


def decoder_forward(x, packed_params):
    """x: (batch, NUM_LATENT) -> (batch, NUM_VARS); matches PyTorch Decoder.forward."""
    w_slab, b_col, b_row = packed_params
    batch = x.shape[0]
    tb, b_pad = _tiles_for(batch)

    # Only the batch dim is padded; the latent dim stays 16, so the kernel never
    # reads feature-dim zero padding and there is no wrapper transpose pass.
    x_p = x.astype(jnp.float32)
    if b_pad != batch:
        x_p = jnp.pad(x_p, ((0, b_pad - batch), (0, 0)))

    out = pl.pallas_call(
        decoder_kernel,
        out_shape=jax.ShapeDtypeStruct((b_pad, OUT_PAD), jnp.float32),
        grid=(b_pad // tb,),
        in_specs=[
            pl.BlockSpec((tb, NUM_LATENT), lambda i: (i, 0)),
            # Constant index_maps: the tiny parameter slabs stay VMEM-resident.
            pl.BlockSpec((NUM_LAYERS, DIM_PAD, DIM_PAD), lambda i: (0, 0, 0)),
            pl.BlockSpec((NUM_LAYERS - 1, DIM_PAD, 1), lambda i: (0, 0, 0)),
            pl.BlockSpec((1, OUT_PAD), lambda i: (0, 0)),
        ],
        out_specs=pl.BlockSpec((tb, OUT_PAD), lambda i: (i, 0)),
        compiler_params=pltpu.CompilerParams(
            dimension_semantics=("parallel",),
            vmem_limit_bytes=48 * 1024 * 1024,   # large tiles fit v5e's small default
        ),
    )(x_p, w_slab, b_col, b_row)

    # Drop batch/output padding; keep PyTorch module semantics.
    return out[:batch, :NUM_VARS]


def init_params(key):
    """Per-layer (W, b) in PyTorch nn.Linear convention: W (out, in), b (out,)."""
    dims = [(NUM_LATENT, NUM_HIDDEN), (NUM_HIDDEN, NUM_HIDDEN),
            (NUM_HIDDEN, NUM_HIDDEN), (NUM_HIDDEN, NUM_VARS)]
    ks = jax.random.split(key, 2 * NUM_LAYERS)
    params = []
    for l, (fan_in, fan_out) in enumerate(dims):
        bound = 1.0 / float(fan_in) ** 0.5
        w = jax.random.uniform(ks[2 * l], (fan_out, fan_in), jnp.float32,
                               -bound, bound)
        b = jax.random.uniform(ks[2 * l + 1], (fan_out,), jnp.float32,
                               -bound, bound)
        params.append((w, b))
    return params


def pack_params(params, compute_dtype=None):
    """Pack all layers into small zero-padded slabs (few DMAs, VMEM-resident)."""
    if compute_dtype is None:
        compute_dtype = _compute_dtype()
    w_slab = jnp.zeros((NUM_LAYERS, DIM_PAD, DIM_PAD), jnp.float32)
    b_col = jnp.zeros((NUM_LAYERS - 1, DIM_PAD, 1), jnp.float32)
    b_row = jnp.zeros((1, OUT_PAD), jnp.float32)
    for l, (w, b) in enumerate(params):
        if l < NUM_LAYERS - 1:
            w_slab = w_slab.at[l, :w.shape[0], :w.shape[1]].set(w)
            b_col = b_col.at[l, :b.shape[0], 0].set(b)
        else:
            # Last layer stored transposed (in, out) for the batch-major matmul.
            w_slab = w_slab.at[l, :w.shape[1], :w.shape[0]].set(w.T)
            b_row = b_row.at[0, :b.shape[0]].set(b)
    return w_slab.astype(compute_dtype), b_col, b_row


def reference_forward(x, params):
    h = x
    for l, (w, b) in enumerate(params):
        h = h @ w.T + b
        if l < NUM_LAYERS - 1:
            h = jnp.tanh(h)
    return h


if __name__ == "__main__":
    key = jax.random.PRNGKey(0)
    k_x, k_p = jax.random.split(key)

    batch = 8
    x = jax.random.normal(k_x, (batch, NUM_LATENT), dtype=jnp.float32)
    params = init_params(k_p)
    packed = pack_params(params)

    fwd = jax.jit(decoder_forward)
    out = jax.block_until_ready(fwd(x, packed))
    ref = reference_forward(x, params)

    assert out.shape == (batch, NUM_VARS)
    tol = 5e-2 if packed[0].dtype == jnp.bfloat16 else 1e-4
    err = float(jnp.max(jnp.abs(out - ref)))
    assert jnp.allclose(out, ref, atol=tol, rtol=tol), err

    print("KERNEL_OK")
</pallas_src>

<mosaic_0001>
module attributes {stable_mosaic.version = 11 : i64} {
  func.func @decoder_kernel(%arg0: i32, %arg1: memref<128x16xf32, #tpu.memory_space<vmem>>, %arg2: memref<4x32x32xf32, #tpu.memory_space<vmem>>, %arg3: memref<3x32x1xf32, #tpu.memory_space<vmem>>, %arg4: memref<1x16xf32, #tpu.memory_space<vmem>>, %arg5: memref<128x16xf32, #tpu.memory_space<vmem>>) attributes {dimension_semantics = [#tpu.dimension_semantics<parallel>], iteration_bounds = array<i64: 2>, scalar_prefetch = 0 : i64, scratch_operands = 0 : i64, tpu.core_type = #tpu.core_type<tc>, window_params = [{transform_indices = @transform_0, window_bounds = array<i64: 128, 16>}, {pipeline_mode = #tpu.pipeline_mode<synchronous>, transform_indices = @transform_1, window_bounds = array<i64: 4, 32, 32>}, {pipeline_mode = #tpu.pipeline_mode<synchronous>, transform_indices = @transform_2, window_bounds = array<i64: 3, 32, 1>}, {pipeline_mode = #tpu.pipeline_mode<synchronous>, transform_indices = @transform_3, window_bounds = array<i64: 1, 16>}, {transform_indices = @transform_4, window_bounds = array<i64: 128, 16>}]} {
    %c0 = arith.constant 0 : index
    %c0_0 = arith.constant 0 : index
    %0 = vector.load %arg1[%c0, %c0_0] : memref<128x16xf32, #tpu.memory_space<vmem>>, vector<128x16xf32>
    %c0_1 = arith.constant 0 : index
    %c0_2 = arith.constant 0 : index
    %c0_3 = arith.constant 0 : index
    %1 = vector.load %arg2[%c0_1, %c0_2, %c0_3] : memref<4x32x32xf32, #tpu.memory_space<vmem>>, vector<1x32x16xf32>
    %2 = vector.shape_cast %1 : vector<1x32x16xf32> to vector<32x16xf32>
    %cst = arith.constant dense<0.000000e+00> : vector<32x128xf32>
    %3 = tpu.matmul %2, %0, %cst {dimension_numbers = #tpu.dot_dimension_numbers<[1], [1], [0], [0], [0, 0, 1, 0], [], []>} : vector<32x16xf32>, vector<128x16xf32>, vector<32x128xf32> -> vector<32x128xf32>
    %c0_4 = arith.constant 0 : index
    %c0_5 = arith.constant 0 : index
    %c0_6 = arith.constant 0 : index
    %4 = vector.load %arg3[%c0_4, %c0_5, %c0_6] : memref<3x32x1xf32, #tpu.memory_space<vmem>>, vector<1x32x1xf32>
    %5 = vector.shape_cast %4 : vector<1x32x1xf32> to vector<32x1xf32>
    %6 = vector.broadcast %5 : vector<32x1xf32> to vector<32x128xf32>
    %7 = arith.addf %3, %6 : vector<32x128xf32>
    %8 = math.tanh %7 : vector<32x128xf32>
    %c1 = arith.constant 1 : index
    %c0_7 = arith.constant 0 : index
    %c0_8 = arith.constant 0 : index
    %9 = vector.load %arg2[%c1, %c0_7, %c0_8] : memref<4x32x32xf32, #tpu.memory_space<vmem>>, vector<1x32x32xf32>
    %10 = vector.shape_cast %9 : vector<1x32x32xf32> to vector<32x32xf32>
    %cst_9 = arith.constant dense<0.000000e+00> : vector<32x128xf32>
    %11 = tpu.matmul %10, %8, %cst_9 {dimension_numbers = #tpu.dot_dimension_numbers<[1], [0], [0], [1], [0, 0, 1, 1], [], []>} : vector<32x32xf32>, vector<32x128xf32>, vector<32x128xf32> -> vector<32x128xf32>
    %c1_10 = arith.constant 1 : index
    %c0_11 = arith.constant 0 : index
    %c0_12 = arith.constant 0 : index
    %12 = vector.load %arg3[%c1_10, %c0_11, %c0_12] : memref<3x32x1xf32, #tpu.memory_space<vmem>>, vector<1x32x1xf32>
    %13 = vector.shape_cast %12 : vector<1x32x1xf32> to vector<32x1xf32>
    %14 = vector.broadcast %13 : vector<32x1xf32> to vector<32x128xf32>
    %15 = arith.addf %11, %14 : vector<32x128xf32>
    %16 = math.tanh %15 : vector<32x128xf32>
    %c2 = arith.constant 2 : index
    %c0_13 = arith.constant 0 : index
    %c0_14 = arith.constant 0 : index
    %17 = vector.load %arg2[%c2, %c0_13, %c0_14] : memref<4x32x32xf32, #tpu.memory_space<vmem>>, vector<1x32x32xf32>
    %18 = vector.shape_cast %17 : vector<1x32x32xf32> to vector<32x32xf32>
    %cst_15 = arith.constant dense<0.000000e+00> : vector<32x128xf32>
    %19 = tpu.matmul %18, %16, %cst_15 {dimension_numbers = #tpu.dot_dimension_numbers<[1], [0], [0], [1], [0, 0, 1, 1], [], []>} : vector<32x32xf32>, vector<32x128xf32>, vector<32x128xf32> -> vector<32x128xf32>
    %c2_16 = arith.constant 2 : index
    %c0_17 = arith.constant 0 : index
    %c0_18 = arith.constant 0 : index
    %20 = vector.load %arg3[%c2_16, %c0_17, %c0_18] : memref<3x32x1xf32, #tpu.memory_space<vmem>>, vector<1x32x1xf32>
    %21 = vector.shape_cast %20 : vector<1x32x1xf32> to vector<32x1xf32>
    %22 = vector.broadcast %21 : vector<32x1xf32> to vector<32x128xf32>
    %23 = arith.addf %19, %22 : vector<32x128xf32>
    %24 = math.tanh %23 : vector<32x128xf32>
    %c3 = arith.constant 3 : index
    %c0_19 = arith.constant 0 : index
    %c0_20 = arith.constant 0 : index
    %25 = vector.load %arg2[%c3, %c0_19, %c0_20] : memref<4x32x32xf32, #tpu.memory_space<vmem>>, vector<1x32x16xf32>
    %26 = vector.shape_cast %25 : vector<1x32x16xf32> to vector<32x16xf32>
    %cst_21 = arith.constant dense<0.000000e+00> : vector<128x16xf32>
    %27 = tpu.matmul %24, %26, %cst_21 {dimension_numbers = #tpu.dot_dimension_numbers<[0], [0], [1], [1], [0, 1, 1, 1], [], []>} : vector<32x128xf32>, vector<32x16xf32>, vector<128x16xf32> -> vector<128x16xf32>
    %c0_22 = arith.constant 0 : index
    %c0_23 = arith.constant 0 : index
    %28 = vector.load %arg4[%c0_22, %c0_23] : memref<1x16xf32, #tpu.memory_space<vmem>>, vector<1x16xf32>
    %29 = vector.broadcast %28 : vector<1x16xf32> to vector<128x16xf32>
    %30 = arith.addf %27, %29 : vector<128x16xf32>
    %c0_24 = arith.constant 0 : index
    %c0_25 = arith.constant 0 : index
    %31 = vector.load %arg5[%c0_24, %c0_25] : memref<128x16xf32, #tpu.memory_space<vmem>>, vector<128x16xf32>
    tpu.vector_store %arg5[%c0_24, %c0_25], %30 {strides = array<i32>} : memref<128x16xf32, #tpu.memory_space<vmem>>, vector<128x16xf32>,
    return
  }
  func.func @transform_0(%arg0: i32) -> (i32, i32) {
    %c0_i32 = arith.constant 0 : i32
    %c0_i32_0 = arith.constant 0 : i32
    return %arg0, %c0_i32 : i32, i32
  }
  func.func @transform_1(%arg0: i32) -> (i32, i32, i32) {
    %c0_i32 = arith.constant 0 : i32
    %c0_i32_0 = arith.constant 0 : i32
    %c0_i32_1 = arith.constant 0 : i32
    %c0_i32_2 = arith.constant 0 : i32
    return %c0_i32, %c0_i32_0, %c0_i32_1 : i32, i32, i32
  }
  func.func @transform_2(%arg0: i32) -> (i32, i32, i32) {
    %c0_i32 = arith.constant 0 : i32
    %c0_i32_0 = arith.constant 0 : i32
    %c0_i32_1 = arith.constant 0 : i32
    %c0_i32_2 = arith.constant 0 : i32
    return %c0_i32, %c0_i32_0, %c0_i32_1 : i32, i32, i32
  }
  func.func @transform_3(%arg0: i32) -> (i32, i32) {
    %c0_i32 = arith.constant 0 : i32
    %c0_i32_0 = arith.constant 0 : i32
    %c0_i32_1 = arith.constant 0 : i32
    return %c0_i32, %c0_i32_0 : i32, i32
  }
  func.func @transform_4(%arg0: i32) -> (i32, i32) {
    %c0_i32 = arith.constant 0 : i32
    %c0_i32_0 = arith.constant 0 : i32
    return %arg0, %c0_i32 : i32, i32
  }
}

</mosaic_0001>

<llo_original>
// kernel: decoder_forward.1
$region0: #{decoder_forward.1}
  #allocation0 [shape = 'u32[]', space=smem, size = 0x4, offset = 0x4, fixed_abs, tag = 'smem constant byte address 0x4 - core index']
  #allocation1 [shape = 'u32[144,128]{1,0:T(1,128)}', space=vmem, size = 0x12000, scoped, tag = 'internal scratch']
  %s0 = inlined_call_operand.vmem [shape: f32[256,16], index: 0, kind: input, shape index: {}]
  %s1 = inlined_call_operand.vmem [shape: f32[4,32,32], index: 1, kind: input, shape index: {}]
  %s2 = inlined_call_operand.vmem [shape: f32[3,32,1], index: 2, kind: input, shape index: {}]
  %s3 = inlined_call_operand.vmem [shape: f32[1,16], index: 3, kind: input, shape index: {}]
  %s4 = inlined_call_operand.vmem [shape: f32[256,16], index: 4, kind: output, shape index: {}]
  %s5 = sld [smem:[#allocation0]]
  $region49: #{decoder_forward.1} parent=0
    _
  %s7 = ssub.s32 1, %s5
  %s8 = scalar_select 0, %s7, %s5
  loop: start=0, step=1, limit=4
  $region2: #{decoder_forward.1} parent=0 // loop_pre_header
    _
  $region3: #{decoder_forward.1} parent=0 // loop_header
    %s10 = sphi 0, %s14
    %p11 = scmp.ge.s32.totalorder %s10, 4
    %s20 = sphi 0, %s22
    %s23 = sphi 0, %s20
    %s24 = sphi 0, %s23
    %s40 = sphi 0, %s24
    %s44 = sphi 0, %s44
    %s46 = sphi 0, %s44
    %s47 = sphi 0, %s46
    %s61 = sphi 0, %s47
    %s65 = sphi 0, %s65
    %s67 = sphi 0, %s65
    %s68 = sphi 0, %s67
    %s82 = sphi 0, %s68
    %s86 = sphi 0, %s86
    %s88 = sphi 0, %s86
    %s89 = sphi 0, %s88
    %s103 = sphi 0, %s89
    %s109 = sphi 0, %s111
    %s112 = sphi 0, %s109
    %s113 = sphi 0, %s112
    %s129 = sphi 0, %s113
  $region4: #{decoder_forward.1} parent=0 // loop_header_branch
    %13 = sbr.rel (%p11) target = $region8
  $region5: #{decoder_forward.1} parent=0 // loop_body
    %s15 = ssub.s32 %s10, 1
    %s16 = ssub.s32 %s10, 2
    %s17 = sadd.s32 %s10, 1
    %s18 = ssub.s32 %s10, %s17
    %p19 = scmp.eq.s32.totalorder %s18, 0
    %s21 = sadd.s32 %s20, 1
    %s22 = scalar_select %p19, %s20, %s21
    %p25 = pneg %p19
    %p26 = scmp.eq.s32.totalorder %s10, 1
    %p27 = por %p25, %p26
    %p28 = scmp.ne.s32.totalorder %s20, %s23
    %p29 = scmp.eq.s32.totalorder %s10, 0
    %p30 = por %p28, %p29
    %p31 = scmp.ne.s32.totalorder %s20, %s23
    %p32 = scmp.eq.s32.totalorder %s15, 1
    %p33 = por %p31, %p32
    %p34 = scmp.ne.s32.totalorder %s23, %s24
    %p35 = scmp.eq.s32.totalorder %s15, 0
    %p36 = por %p34, %p35
    %p37 = scmp.ne.s32.totalorder %s23, %s24
    %p38 = scmp.eq.s32.totalorder %s16, 1
    %p39 = por %p37, %p38
    %p41 = scmp.ne.s32.totalorder %s24, %s40
    %p42 = scmp.eq.s32.totalorder %s16, 0
    %p43 = por %p41, %p42
    %s45 = sadd.s32 %s44, 1
    %p48 = scmp.eq.s32.totalorder %s10, 1
    %p49 = scmp.ne.s32.totalorder %s44, %s46
    %p50 = scmp.eq.s32.totalorder %s10, 0
    %p51 = por %p49, %p50
    %p52 = scmp.ne.s32.totalorder %s44, %s46
    %p53 = scmp.eq.s32.totalorder %s15, 1
    %p54 = por %p52, %p53
    %p55 = scmp.ne.s32.totalorder %s46, %s47
    %p56 = scmp.eq.s32.totalorder %s15, 0
    %p57 = por %p55, %p56
    %p58 = scmp.ne.s32.totalorder %s46, %s47
    %p59 = scmp.eq.s32.totalorder %s16, 1
    %p60 = por %p58, %p59
    %p62 = scmp.ne.s32.totalorder %s47, %s61
    %p63 = scmp.eq.s32.totalorder %s16, 0
    %p64 = por %p62, %p63
    %s66 = sadd.s32 %s65, 1
    %p69 = scmp.eq.s32.totalorder %s10, 1
    %p70 = scmp.ne.s32.totalorder %s65, %s67
    %p71 = scmp.eq.s32.totalorder %s10, 0
    %p72 = por %p70, %p71
    %p73 = scmp.ne.s32.totalorder %s65, %s67
    %p74 = scmp.eq.s32.totalorder %s15, 1
    %p75 = por %p73, %p74
    %p76 = scmp.ne.s32.totalorder %s67, %s68
    %p77 = scmp.eq.s32.totalorder %s15, 0
    %p78 = por %p76, %p77
    %p79 = scmp.ne.s32.totalorder %s67, %s68
    %p80 = scmp.eq.s32.totalorder %s16, 1
    %p81 = por %p79, %p80
    %p83 = scmp.ne.s32.totalorder %s68, %s82
    %p84 = scmp.eq.s32.totalorder %s16, 0
    %p85 = por %p83, %p84
    %s87 = sadd.s32 %s86, 1
    %p90 = scmp.eq.s32.totalorder %s10, 1
    %p91 = scmp.ne.s32.totalorder %s86, %s88
    %p92 = scmp.eq.s32.totalorder %s10, 0
    %p93 = por %p91, %p92
    %p94 = scmp.ne.s32.totalorder %s86, %s88
    %p95 = scmp.eq.s32.totalorder %s15, 1
    %p96 = por %p94, %p95
    %p97 = scmp.ne.s32.totalorder %s88, %s89
    %p98 = scmp.eq.s32.totalorder %s15, 0
    %p99 = por %p97, %p98
    %p100 = scmp.ne.s32.totalorder %s88, %s89
    %p101 = scmp.eq.s32.totalorder %s16, 1
    %p102 = por %p100, %p101
    %p104 = scmp.ne.s32.totalorder %s89, %s103
    %p105 = scmp.eq.s32.totalorder %s16, 0
    %p106 = por %p104, %p105
    %s107 = ssub.s32 %s10, %s17
    %p108 = scmp.eq.s32.totalorder %s107, 0
    %s110 = sadd.s32 %s109, 1
    %s111 = scalar_select %p108, %s109, %s110
    %p114 = pneg %p108
    %p115 = scmp.eq.s32.totalorder %s10, 1
    %p116 = por %p114, %p115
    %p117 = scmp.ne.s32.totalorder %s109, %s112
    %p118 = scmp.eq.s32.totalorder %s10, 0
    %p119 = por %p117, %p118
    %p120 = scmp.ne.s32.totalorder %s109, %s112
    %p121 = scmp.eq.s32.totalorder %s15, 1
    %p122 = por %p120, %p121
    %p123 = scmp.ne.s32.totalorder %s112, %s113
    %p124 = scmp.eq.s32.totalorder %s15, 0
    %p125 = por %p123, %p124
    %p126 = scmp.ne.s32.totalorder %s112, %s113
    %p127 = scmp.eq.s32.totalorder %s16, 1
    %p128 = por %p126, %p127
    %p130 = scmp.ne.s32.totalorder %s113, %s129
    %p131 = scmp.eq.s32.totalorder %s16, 0
    %p132 = por %p130, %p131
    %p133 = scmp.le.s32.totalorder 1, %s10
    %p134 = scmp.lt.s32.totalorder %s10, 3
    %p135 = pnand %p133, %p134
    %p136 = pneg %p135
    // Predicated region
    $region9: #{decoder_forward.1} parent=5 // pred_check
      _
    $region10: #{decoder_forward.1} parent=5 // pred_check_branch
      %138 = sbr.rel (%p135) target = $region12
    $region11: #{decoder_forward.1} parent=5 // pred_region
      %s139 = ssub.s32 %s10, 1
      // Predicated region
      $region13: #{decoder_forward.1} parent=11 // pred_check
        %p140 = pneg %p57
      $region14: #{decoder_forward.1} parent=11 // pred_check_branch
        %142 = sbr.rel (%p140) target = $region16
      $region15: #{decoder_forward.1} parent=11 // pred_region
        _
      $region16: #{decoder_forward.1} parent=11 // pred_fallthru
        _
      // Predicated region
      $region17: #{decoder_forward.1} parent=11 // pred_check
        %p143 = pneg %p78
      $region18: #{decoder_forward.1} parent=11 // pred_check_branch
        %145 = sbr.rel (%p143) target = $region20
      $region19: #{decoder_forward.1} parent=11 // pred_region
        _
      $region20: #{decoder_forward.1} parent=11 // pred_fallthru
        _
      // Predicated region
      $region21: #{decoder_forward.1} parent=11 // pred_check
        %p146 = pneg %p99
      $region22: #{decoder_forward.1} parent=11 // pred_check_branch
        %148 = sbr.rel (%p146) target = $region24
      $region23: #{decoder_forward.1} parent=11 // pred_region
        _
      $region24: #{decoder_forward.1} parent=11 // pred_fallthru
        _
    $region12: #{decoder_forward.1} parent=5 // pred_fallthru
      _
    %p149 = scmp.lt.s32.totalorder %s10, 2
    // Predicated region
    $region25: #{decoder_forward.1} parent=5 // pred_check
      %p150 = pneg %p149
    $region26: #{decoder_forward.1} parent=5 // pred_check_branch
      %152 = sbr.rel (%p150) target = $region28
    $region27: #{decoder_forward.1} parent=5 // pred_region
      // Predicated region
      $region29: #{decoder_forward.1} parent=27 // pred_check
        %p153 = pneg %p30
      $region30: #{decoder_forward.1} parent=27 // pred_check_branch
        %155 = sbr.rel (%p153) target = $region32
      $region31: #{decoder_forward.1} parent=27 // pred_region
        %s156 = smul.u32 16, %s10
        %p157 = scmp.lt.s32.totalorder %s156, 31
        %s158 = scalar_select %p157, %s156, 31
        %s159 = smul.addr %s158, 8
        %s160 = scalar_lea.vmem %s0, %s159
        %s161 = smul.u32 16, %s10
      $region32: #{decoder_forward.1} parent=27 // pred_fallthru
        _
    $region28: #{decoder_forward.1} parent=5 // pred_fallthru
      _
    %p162 = scmp.le.s32.totalorder 1, %s10
    %p163 = scmp.lt.s32.totalorder %s10, 3
    %p164 = pnand %p162, %p163
    %p165 = pneg %p164
    // Predicated region
    $region33: #{decoder_forward.1} parent=5 // pred_check
      _
    $region34: #{decoder_forward.1} parent=5 // pred_check_branch
      %167 = sbr.rel (%p164) target = $region36
    $region35: #{decoder_forward.1} parent=5 // pred_region
      %s168 = ssub.s32 %s10, 1
      %s169 = smul.u32 16, %s15
      %p170 = scmp.lt.s32.totalorder %s169, 31
      %s171 = scalar_select %p170, %s169, 31
      %s172 = smul.addr %s171, 8
      %s173 = scalar_lea.vmem %s0, %s172
      %p174 = pneg %p36
      %p175 = pneg %p33
      %p176 = pneg %p57
      %p177 = pneg %p54
      %p178 = pneg %p78
      %p179 = pneg %p75
      %p180 = pneg %p99
      %p181 = pneg %p96
      %p182 = pneg %p125
      %p183 = pneg %p122
      %s184 = smul.u32 16, %s15
      %p185 = scmp.lt.s32.totalorder %s184, 31
      %s186 = scalar_select %p185, %s184, 31
      %s187 = smul.addr %s186, 8
      %s188 = scalar_lea.vmem %s4, %s187
      %s189 = smul.u32 16, %s15
      %p190 = scmp.lt.s32.totalorder %s189, 31
      %s191 = scalar_select %p190, %s189, 31
      %s192 = smul.addr %s191, 8
      %s193 = scalar_lea.vmem %s0, %s192
      %s194 = smul.u32 16, %s15
      %s195 = smul.u32 16, %s15
      %p196 = scmp.lt.s32.totalorder %s195, 31
      %s197 = scalar_select %p196, %s195, 31
      %s198 = smul.addr %s197, 8
      %s199 = scalar_lea.vmem %s4, %s198
      %s200 = smul.u32 16, %s15
      %v201 = vld [vmem:[%s193] sm:$0xff]
      %v202 = vld [vmem:[%s193 + $0x8] sm:$0xff]
      %v203 = vld [vmem:[%s193 + $0x10] sm:$0xff]
      %v204 = vld [vmem:[%s193 + $0x18] sm:$0xff]
      %v205 = vld [vmem:[%s193 + $0x20] sm:$0xff]
      %v206 = vld [vmem:[%s193 + $0x28] sm:$0xff]
      %v207 = vld [vmem:[%s193 + $0x30] sm:$0xff]
      %v208 = vld [vmem:[%s193 + $0x38] sm:$0xff]
      %v209 = vld [vmem:[%s193 + $0x40] sm:$0xff]
      %v210 = vld [vmem:[%s193 + $0x48] sm:$0xff]
      %v211 = vld [vmem:[%s193 + $0x50] sm:$0xff]
      %v212 = vld [vmem:[%s193 + $0x58] sm:$0xff]
      %v213 = vld [vmem:[%s193 + $0x60] sm:$0xff]
      %v214 = vld [vmem:[%s193 + $0x68] sm:$0xff]
      %v215 = vld [vmem:[%s193 + $0x70] sm:$0xff]
      %v216 = vld [vmem:[%s193 + $0x78] sm:$0xff]
      %v217 = vld [vmem:[%s1] sm:$0xff]
      %v218 = vld [vmem:[%s1 + $0x8] sm:$0xff]
      %v219 = vld [vmem:[%s1 + $0x10] sm:$0xff]
      %v220 = vld [vmem:[%s1 + $0x18] sm:$0xff]
      %v221 = vld [vmem:[%s2] sm:$0xff]
      %v222 = vld [vmem:[%s2 + $0x8] sm:$0xff]
      %v223 = vld [vmem:[%s2 + $0x10] sm:$0xff]
      %v224 = vld [vmem:[%s2 + $0x18] sm:$0xff]
      %226 = vset.pattern.permute.xlu0 0
      %227 = vperm.xlu0 %226, %v221
      %v228 = vpop.permute.xlu0 %227
      %231 = vset.pattern.permute.xlu0 0
      %232 = vperm.xlu0 %231, %v222
      %v233 = vpop.permute.xlu0 %232
      %236 = vset.pattern.permute.xlu0 0
      %237 = vperm.xlu0 %236, %v223
      %v238 = vpop.permute.xlu0 %237
      %241 = vset.pattern.permute.xlu0 0
      %242 = vperm.xlu0 %241, %v224
      %v243 = vpop.permute.xlu0 %242
      %vm245 = vcmask 130048
      %v247 = vsel %vm245, %v217, 0
      %v250 = vsel %vm245, %v218, 0
      %v253 = vsel %vm245, %v219, 0
      %v256 = vsel %vm245, %v220, 0
      %v259 = vsel %vm245, %v201, 0
      %v262 = vsel %vm245, %v202, 0
      %v265 = vsel %vm245, %v203, 0
      %v268 = vsel %vm245, %v204, 0
      %v271 = vsel %vm245, %v205, 0
      %v274 = vsel %vm245, %v206, 0
      %v277 = vsel %vm245, %v207, 0
      %v280 = vsel %vm245, %v208, 0
      %v283 = vsel %vm245, %v209, 0
      %v286 = vsel %vm245, %v210, 0
      %v289 = vsel %vm245, %v211, 0
      %v292 = vsel %vm245, %v212, 0
      %v295 = vsel %vm245, %v213, 0
      %v298 = vsel %vm245, %v214, 0
      %v301 = vsel %vm245, %v215, 0
      %v304 = vsel %vm245, %v216, 0
      %306 = vmatprep.subr.mxu0 0.0
      %307 = vmatpush1.xpose.msra.mxu0 %v259
      %308 = vmatprep.subr.mxu0 0.0
      %309 = vmatpush1.xpose.msra.mxu0 %v262
      %310 = vmatprep.subr.mxu0 0.0
      %311 = vmatpush1.xpose.msra.mxu0 %v265
      %312 = vmatprep.subr.mxu0 0.0
      %313 = vmatpush1.xpose.msra.mxu0 %v268
      %314 = vmatprep.subr.mxu0 0.0
      %315 = vmatpush1.xpose.msra.mxu0 %v271
      %316 = vmatprep.subr.mxu0 0.0
      %317 = vmatpush1.xpose.msra.mxu0 %v274
      %318 = vmatprep.subr.mxu0 0.0
      %319 = vmatpush1.xpose.msra.mxu0 %v277
      %320 = vmatprep.subr.mxu0 0.0
      %321 = vmatpush1.xpose.msra.mxu0 %v280
      %322 = vmatprep.subr.mxu0 0.0
      %323 = vmatpush1.xpose.msra.mxu0 %v283
      %324 = vmatprep.subr.mxu0 0.0
      %325 = vmatpush1.xpose.msra.mxu0 %v286
      %326 = vmatprep.subr.mxu0 0.0
      %327 = vmatpush1.xpose.msra.mxu0 %v289
      %328 = vmatprep.subr.mxu0 0.0
      %329 = vmatpush1.xpose.msra.mxu0 %v292
      %330 = vmatprep.subr.mxu0 0.0
      %331 = vmatpush1.xpose.msra.mxu0 %v295
      %332 = vmatprep.subr.mxu0 0.0
      %333 = vmatpush1.xpose.msra.mxu0 %v298
      %334 = vmatprep.subr.mxu0 0.0
      %335 = vmatpush1.xpose.msra.mxu0 %v301
      %336 = vmatprep.subr.mxu0 0.0
      %337 = vmatpush1.xpose.msra.mxu0 %v304
      %338 = vmatprep.subr.mxu0 0.0
      %339 = vmatpush1.xpose.msra.mxu0 0.0
      %340 = vmatprep.subr.mxu0 0.0
      %341 = vmatpush1.xpose.msra.mxu0 0.0
      %342 = vmatprep.subr.mxu0 0.0
      %343 = vmatpush1.xpose.msra.mxu0 0.0
      %344 = vmatprep.subr.mxu0 0.0
      %345 = vmatpush1.xpose.msra.mxu0 0.0
      %346 = vmatprep.subr.mxu0 0.0
      %347 = vmatpush1.xpose.msra.mxu0 0.0
      %348 = vmatprep.subr.mxu0 0.0
      %349 = vmatpush1.xpose.msra.mxu0 0.0
      %350 = vmatprep.subr.mxu0 0.0
      %351 = vmatpush1.xpose.msra.mxu0 0.0
      %352 = vmatprep.subr.mxu0 0.0
      %353 = vmatpush1.xpose.msra.mxu0 0.0
      %354 = vmatprep.subr.mxu0 0.0
      %355 = vmatpush1.xpose.msra.mxu0 0.0
      %356 = vmatprep.subr.mxu0 0.0
      %357 = vmatpush1.xpose.msra.mxu0 0.0
      %358 = vmatprep.subr.mxu0 0.0
      %359 = vmatpush1.xpose.msra.mxu0 0.0
      %360 = vmatprep.subr.mxu0 0.0
      %361 = vmatpush1.xpose.msra.mxu0 0.0
      %362 = vmatprep.subr.mxu0 0.0
      %363 = vmatpush1.xpose.msra.mxu0 0.0
      %364 = vmatprep.subr.mxu0 0.0
      %365 = vmatpush1.xpose.msra.mxu0 0.0
      %366 = vmatprep.subr.mxu0 0.0
      %367 = vmatpush1.xpose.msra.mxu0 0.0
      %368 = vmatprep.subr.mxu0 0.0
      %369 = vmatpush1.xpose.msra.mxu0 0.0
      %370 = vmatprep.mubr.f32.mxu0 0.0
      %371 = vmatmul.mubr.f32.gmra.mrb[0].mxu0 %v247
      %v372 = vpop.f32.mrb[0].mxu0
      %v373 = vadd.f32 %v228, %v372
      %v374 = vpop.f32.mrb[0].mxu0
      %375 = vmatprep.mubr.f32.mxu0 0.0
      %376 = vmatmul.mubr.f32.gmra.mrb[0].mxu0 %v250
      %v377 = vpop.f32.mrb[0].mxu0
      %v378 = vadd.f32 %v233, %v377
      %v379 = vpop.f32.mrb[0].mxu0
      %380 = vmatprep.mubr.f32.mxu0 0.0
      %381 = vmatmul.mubr.f32.gmra.mrb[0].mxu0 %v253
      %v382 = vpop.f32.mrb[0].mxu0
      %v383 = vadd.f32 %v238, %v382
      %v384 = vpop.f32.mrb[0].mxu0
      %385 = vmatprep.mubr.f32.mxu0 0.0
      %386 = vmatmul.mubr.f32.gmra.mrb[0].mxu0 %v256
      %v387 = vpop.f32.mrb[0].mxu0
      %v388 = vadd.f32 %v243, %v387
      %v389 = vpop.f32.mrb[0].mxu0
      %390 = vdwg.mxu0
      %v391 = vtanh.pop %v373
      %v392 = vtanh.pop %v378
      %v393 = vtanh.pop %v383
      %v394 = vtanh.pop %v388
      %s395 = scalar_lea.vmem %s1, 32
      %v396 = vld [vmem:[%s395] sm:$0xff]
      %v397 = vld [vmem:[%s395 + $0x8] sm:$0xff]
      %v398 = vld [vmem:[%s395 + $0x10] sm:$0xff]
      %v399 = vld [vmem:[%s395 + $0x18] sm:$0xff]
      %s400 = scalar_lea.vmem %s2, 32
      %v401 = vld [vmem:[%s400] sm:$0xff]
      %v402 = vld [vmem:[%s400 + $0x8] sm:$0xff]
      %v403 = vld [vmem:[%s400 + $0x10] sm:$0xff]
      %v404 = vld [vmem:[%s400 + $0x18] sm:$0xff]
      %406 = vset.pattern.permute.xlu0 0
      %407 = vperm.xlu0 %406, %v401
      %v408 = vpop.permute.xlu0 %407
      %411 = vset.pattern.permute.xlu0 0
      %412 = vperm.xlu0 %411, %v402
      %v413 = vpop.permute.xlu0 %412
      %416 = vset.pattern.permute.xlu0 0
      %417 = vperm.xlu0 %416, %v403
      %v418 = vpop.permute.xlu0 %417
      %421 = vset.pattern.permute.xlu0 0
      %422 = vperm.xlu0 %421, %v404
      %v423 = vpop.permute.xlu0 %422
      %vm425 = vcmask 261120
      %v427 = vsel %vm425, %v396, 0
      %v430 = vsel %vm425, %v397, 0
      %v433 = vsel %vm425, %v398, 0
      %v436 = vsel %vm425, %v399, 0
      %438 = vmatprep.subr.mxu0 0.0
      %439 = vmatpush1.msra.mxu0 %v391
      %440 = vmatprep.subr.mxu0 0.0
      %441 = vmatpush1.msra.mxu0 %v392
      %442 = vmatprep.subr.mxu0 0.0
      %443 = vmatpush1.msra.mxu0 %v393
      %444 = vmatprep.subr.mxu0 0.0
      %445 = vmatpush1.msra.mxu0 %v394
      %446 = vmatprep.subr.mxu0 0.0
      %447 = vmatpush1.msra.mxu0 0.0
      %448 = vmatprep.subr.mxu0 0.0
      %449 = vmatpush1.msra.mxu0 0.0
      %450 = vmatprep.subr.mxu0 0.0
      %451 = vmatpush1.msra.mxu0 0.0
      %452 = vmatprep.subr.mxu0 0.0
      %453 = vmatpush1.msra.mxu0 0.0
      %454 = vmatprep.subr.mxu0 0.0
      %455 = vmatpush1.msra.mxu0 0.0
      %456 = vmatprep.subr.mxu0 0.0
      %457 = vmatpush1.msra.mxu0 0.0
      %458 = vmatprep.subr.mxu0 0.0
      %459 = vmatpush1.msra.mxu0 0.0
      %460 = vmatprep.subr.mxu0 0.0
      %461 = vmatpush1.msra.mxu0 0.0
      %462 = vmatprep.subr.mxu0 0.0
      %463 = vmatpush1.msra.mxu0 0.0
      %464 = vmatprep.subr.mxu0 0.0
      %465 = vmatpush1.msra.mxu0 0.0
      %466 = vmatprep.subr.mxu0 0.0
      %467 = vmatpush1.msra.mxu0 0.0
      %468 = vmatprep.subr.mxu0 0.0
      %469 = vmatpush1.msra.mxu0 0.0
      %470 = vmatprep.subr.mxu0 0.0
      %471 = vmatpush1.msra.mxu0 0.0
      %472 = vmatprep.subr.mxu0 0.0
      %473 = vmatpush1.msra.mxu0 0.0
      %474 = vmatprep.subr.mxu0 0.0
      %475 = vmatpush1.msra.mxu0 0.0
      %476 = vmatprep.subr.mxu0 0.0
      %477 = vmatpush1.msra.mxu0 0.0
      %478 = vmatprep.subr.mxu0 0.0
      %479 = vmatpush1.msra.mxu0 0.0
      %480 = vmatprep.subr.mxu0 0.0
      %481 = vmatpush1.msra.mxu0 0.0
      %482 = vmatprep.subr.mxu0 0.0
      %483 = vmatpush1.msra.mxu0 0.0
      %484 = vmatprep.subr.mxu0 0.0
      %485 = vmatpush1.msra.mxu0 0.0
      %486 = vmatprep.subr.mxu0 0.0
      %487 = vmatpush1.msra.mxu0 0.0
      %488 = vmatprep.subr.mxu0 0.0
      %489 = vmatpush1.msra.mxu0 0.0
      %490 = vmatprep.subr.mxu0 0.0
      %491 = vmatpush1.msra.mxu0 0.0
      %492 = vmatprep.subr.mxu0 0.0
      %493 = vmatpush1.msra.mxu0 0.0
      %494 = vmatprep.subr.mxu0 0.0
      %495 = vmatpush1.msra.mxu0 0.0
      %496 = vmatprep.subr.mxu0 0.0
      %497 = vmatpush1.msra.mxu0 0.0
      %498 = vmatprep.subr.mxu0 0.0
      %499 = vmatpush1.msra.mxu0 0.0
      %500 = vmatprep.subr.mxu0 0.0
      %501 = vmatpush1.msra.mxu0 0.0
      %502 = vmatprep.mubr.f32.mxu0 0.0
      %503 = vmatmul.mubr.f32.gmra.mrb[0].mxu0 %v427
      %v504 = vpop.f32.mrb[0].mxu0
      %v505 = vadd.f32 %v408, %v504
      %v506 = vpop.f32.mrb[0].mxu0
      %507 = vmatprep.mubr.f32.mxu0 0.0
      %508 = vmatmul.mubr.f32.gmra.mrb[0].mxu0 %v430
      %v509 = vpop.f32.mrb[0].mxu0
      %v510 = vadd.f32 %v413, %v509
      %v511 = vpop.f32.mrb[0].mxu0
      %512 = vmatprep.mubr.f32.mxu0 0.0
      %513 = vmatmul.mubr.f32.gmra.mrb[0].mxu0 %v433
      %v514 = vpop.f32.mrb[0].mxu0
      %v515 = vadd.f32 %v418, %v514
      %v516 = vpop.f32.mrb[0].mxu0
      %517 = vmatprep.mubr.f32.mxu0 0.0
      %518 = vmatmul.mubr.f32.gmra.mrb[0].mxu0 %v436
      %v519 = vpop.f32.mrb[0].mxu0
      %v520 = vadd.f32 %v423, %v519
      %v521 = vpop.f32.mrb[0].mxu0
      %522 = vdwg.mxu0
      %v523 = vtanh.pop %v505
      %v524 = vtanh.pop %v510
      %v525 = vtanh.pop %v515
      %v526 = vtanh.pop %v520
      %s527 = scalar_lea.vmem %s1, 64
      %v528 = vld [vmem:[%s527] sm:$0xff]
      %v529 = vld [vmem:[%s527 + $0x8] sm:$0xff]
      %v530 = vld [vmem:[%s527 + $0x10] sm:$0xff]
      %v531 = vld [vmem:[%s527 + $0x18] sm:$0xff]
      %s532 = scalar_lea.vmem %s2, 64
      %v533 = vld [vmem:[%s532] sm:$0xff]
      %v534 = vld [vmem:[%s532 + $0x8] sm:$0xff]
      %v535 = vld [vmem:[%s532 + $0x10] sm:$0xff]
      %v536 = vld [vmem:[%s532 + $0x18] sm:$0xff]
      %538 = vset.pattern.permute.xlu0 0
      %539 = vperm.xlu0 %538, %v533
      %v540 = vpop.permute.xlu0 %539
      %543 = vset.pattern.permute.xlu0 0
      %544 = vperm.xlu0 %543, %v534
      %v545 = vpop.permute.xlu0 %544
      %548 = vset.pattern.permute.xlu0 0
      %549 = vperm.xlu0 %548, %v535
      %v550 = vpop.permute.xlu0 %549
      %553 = vset.pattern.permute.xlu0 0
      %554 = vperm.xlu0 %553, %v536
      %v555 = vpop.permute.xlu0 %554
      %v558 = vsel %vm425, %v528, 0
      %v561 = vsel %vm425, %v529, 0
      %v564 = vsel %vm425, %v530, 0
      %v567 = vsel %vm425, %v531, 0
      %569 = vmatprep.subr.mxu0 0.0
      %570 = vmatpush1.msra.mxu0 %v523
      %571 = vmatprep.subr.mxu0 0.0
      %572 = vmatpush1.msra.mxu0 %v524
      %573 = vmatprep.subr.mxu0 0.0
      %574 = vmatpush1.msra.mxu0 %v525
      %575 = vmatprep.subr.mxu0 0.0
      %576 = vmatpush1.msra.mxu0 %v526
      %577 = vmatprep.subr.mxu0 0.0
      %578 = vmatpush1.msra.mxu0 0.0
      %579 = vmatprep.subr.mxu0 0.0
      %580 = vmatpush1.msra.mxu0 0.0
      %581 = vmatprep.subr.mxu0 0.0
      %582 = vmatpush1.msra.mxu0 0.0
      %583 = vmatprep.subr.mxu0 0.0
      %584 = vmatpush1.msra.mxu0 0.0
      %585 = vmatprep.subr.mxu0 0.0
      %586 = vmatpush1.msra.mxu0 0.0
      %587 = vmatprep.subr.mxu0 0.0
      %588 = vmatpush1.msra.mxu0 0.0
      %589 = vmatprep.subr.mxu0 0.0
      %590 = vmatpush1.msra.mxu0 0.0
      %591 = vmatprep.subr.mxu0 0.0
      %592 = vmatpush1.msra.mxu0 0.0
      %593 = vmatprep.subr.mxu0 0.0
      %594 = vmatpush1.msra.mxu0 0.0
      %595 = vmatprep.subr.mxu0 0.0
      %596 = vmatpush1.msra.mxu0 0.0
      %597 = vmatprep.subr.mxu0 0.0
      %598 = vmatpush1.msra.mxu0 0.0
      %599 = vmatprep.subr.mxu0 0.0
      %600 = vmatpush1.msra.mxu0 0.0
      %601 = vmatprep.subr.mxu0 0.0
      %602 = vmatpush1.msra.mxu0 0.0
      %603 = vmatprep.subr.mxu0 0.0
      %604 = vmatpush1.msra.mxu0 0.0
      %605 = vmatprep.subr.mxu0 0.0
      %606 = vmatpush1.msra.mxu0 0.0
      %607 = vmatprep.subr.mxu0 0.0
      %608 = vmatpush1.msra.mxu0 0.0
      %609 = vmatprep.subr.mxu0 0.0
      %610 = vmatpush1.msra.mxu0 0.0
      %611 = vmatprep.subr.mxu0 0.0
      %612 = vmatpush1.msra.mxu0 0.0
      %613 = vmatprep.subr.mxu0 0.0
      %614 = vmatpush1.msra.mxu0 0.0
      %615 = vmatprep.subr.mxu0 0.0
      %616 = vmatpush1.msra.mxu0 0.0
      %617 = vmatprep.subr.mxu0 0.0
      %618 = vmatpush1.msra.mxu0 0.0
      %619 = vmatprep.subr.mxu0 0.0
      %620 = vmatpush1.msra.mxu0 0.0
      %621 = vmatprep.subr.mxu0 0.0
      %622 = vmatpush1.msra.mxu0 0.0
      %623 = vmatprep.subr.mxu0 0.0
      %624 = vmatpush1.msra.mxu0 0.0
      %625 = vmatprep.subr.mxu0 0.0
      %626 = vmatpush1.msra.mxu0 0.0
      %627 = vmatprep.subr.mxu0 0.0
      %628 = vmatpush1.msra.mxu0 0.0
      %629 = vmatprep.subr.mxu0 0.0
      %630 = vmatpush1.msra.mxu0 0.0
      %631 = vmatprep.subr.mxu0 0.0
      %632 = vmatpush1.msra.mxu0 0.0
      %633 = vmatprep.mubr.f32.mxu0 0.0
      %634 = vmatmul.mubr.f32.gmra.mrb[0].mxu0 %v558
      %v635 = vpop.f32.mrb[0].mxu0
      %v636 = vadd.f32 %v540, %v635
      %v637 = vpop.f32.mrb[0].mxu0
      %638 = vmatprep.mubr.f32.mxu0 0.0
      %639 = vmatmul.mubr.f32.gmra.mrb[0].mxu0 %v561
      %v640 = vpop.f32.mrb[0].mxu0
      %v641 = vadd.f32 %v545, %v640
      %v642 = vpop.f32.mrb[0].mxu0
      %643 = vmatprep.mubr.f32.mxu0 0.0
      %644 = vmatmul.mubr.f32.gmra.mrb[0].mxu0 %v564
      %v645 = vpop.f32.mrb[0].mxu0
      %v646 = vadd.f32 %v550, %v645
      %v647 = vpop.f32.mrb[0].mxu0
      %648 = vmatprep.mubr.f32.mxu0 0.0
      %649 = vmatmul.mubr.f32.gmra.mrb[0].mxu0 %v567
      %v650 = vpop.f32.mrb[0].mxu0
      %v651 = vadd.f32 %v555, %v650
      %v652 = vpop.f32.mrb[0].mxu0
      %653 = vdwg.mxu0
      %v654 = vtanh.pop %v636
      %v655 = vtanh.pop %v641
      %v656 = vtanh.pop %v646
      %v657 = vtanh.pop %v651
      %s658 = scalar_lea.vmem %s1, 96
      %v659 = vld [vmem:[%s658] sm:$0xff]
      %v660 = vld [vmem:[%s658 + $0x8] sm:$0xff]
      %v661 = vld [vmem:[%s658 + $0x10] sm:$0xff]
      %v662 = vld [vmem:[%s658 + $0x18] sm:$0xff]
      %v663 = vld [vmem:[%s3] sm:$0x1]
      %v665 = vlaneseq
      %v666 = vshrl.u32 %v665, 7
      %v667 = vsub.s32 0, %v666
      %v668 = vrot.slane %v663, %v667
      %670 = vxpose.xlu0.b32.start [1/16] %v654, 128
      %671 = vxpose.xlu0.b32.cont [2/16] %v655, 128
      %672 = vxpose.xlu0.b32.cont [3/16] %v656, 128
      %673 = vxpose.xlu0.b32.cont [4/16] %v657, 128
      %674 = vxpose.xlu0.b32.cont [5/16] 0.0, 128
      %675 = vxpose.xlu0.b32.cont [6/16] 0.0, 128
      %676 = vxpose.xlu0.b32.cont [7/16] 0.0, 128
      %677 = vxpose.xlu0.b32.cont [8/16] 0.0, 128
      %678 = vxpose.xlu0.b32.cont [9/16] 0.0, 128
      %679 = vxpose.xlu0.b32.cont [10/16] 0.0, 128
      %680 = vxpose.xlu0.b32.cont [11/16] 0.0, 128
      %681 = vxpose.xlu0.b32.cont [12/16] 0.0, 128
      %682 = vxpose.xlu0.b32.cont [13/16] 0.0, 128
      %683 = vxpose.xlu0.b32.cont [14/16] 0.0, 128
      %684 = vxpose.xlu0.b32.cont [15/16] 0.0, 128
      %685 = vxpose.xlu0.b32.end [16/16] 0.0, 128
      %v686 = vpop.trf.xlu0
      %v687 = vpop.trf.xlu0
      %v688 = vpop.trf.xlu0
      %v689 = vpop.trf.xlu0
      %v690 = vpop.trf.xlu0
      %v691 = vpop.trf.xlu0
      %v692 = vpop.trf.xlu0
      %v693 = vpop.trf.xlu0
      %v694 = vpop.trf.xlu0
      %v695 = vpop.trf.xlu0
      %v696 = vpop.trf.xlu0
      %v697 = vpop.trf.xlu0
      %v698 = vpop.trf.xlu0
      %v699 = vpop.trf.xlu0
      %v700 = vpop.trf.xlu0
      %v701 = vpop.trf.xlu0
      %v703 = vsel %vm425, %v686, 0
      %v706 = vsel %vm425, %v687, 0
      %v709 = vsel %vm425, %v688, 0
      %v712 = vsel %vm425, %v689, 0
      %v715 = vsel %vm425, %v690, 0
      %v718 = vsel %vm425, %v691, 0
      %v721 = vsel %vm425, %v692, 0
      %v724 = vsel %vm425, %v693, 0
      %v727 = vsel %vm425, %v694, 0
      %v730 = vsel %vm425, %v695, 0
      %v733 = vsel %vm425, %v696, 0
      %v736 = vsel %vm425, %v697, 0
      %v739 = vsel %vm425, %v698, 0
      %v742 = vsel %vm425, %v699, 0
      %v745 = vsel %vm425, %v700, 0
      %v748 = vsel %vm425, %v701, 0
      %750 = vmatprep.subr.mxu0 0.0
      %751 = vmatpush1.msra.mxu0 %v659
      %752 = vmatprep.subr.mxu0 0.0
      %753 = vmatpush1.msra.mxu0 %v660
      %754 = vmatprep.subr.mxu0 0.0
      %755 = vmatpush1.msra.mxu0 %v661
      %756 = vmatprep.subr.mxu0 0.0
      %757 = vmatpush1.msra.mxu0 %v662
      %758 = vmatprep.subr.mxu0 0.0
      %759 = vmatpush1.msra.mxu0 0.0
      %760 = vmatprep.subr.mxu0 0.0
      %761 = vmatpush1.msra.mxu0 0.0
      %762 = vmatprep.subr.mxu0 0.0
      %763 = vmatpush1.msra.mxu0 0.0
      %764 = vmatprep.subr.mxu0 0.0
      %765 = vmatpush1.msra.mxu0 0.0
      %766 = vmatprep.subr.mxu0 0.0
      %767 = vmatpush1.msra.mxu0 0.0
      %768 = vmatprep.subr.mxu0 0.0
      %769 = vmatpush1.msra.mxu0 0.0
      %770 = vmatprep.subr.mxu0 0.0
      %771 = vmatpush1.msra.mxu0 0.0
      %772 = vmatprep.subr.mxu0 0.0
      %773 = vmatpush1.msra.mxu0 0.0
      %774 = vmatprep.subr.mxu0 0.0
      %775 = vmatpush1.msra.mxu0 0.0
      %776 = vmatprep.subr.mxu0 0.0
      %777 = vmatpush1.msra.mxu0 0.0
      %778 = vmatprep.subr.mxu0 0.0
      %779 = vmatpush1.msra.mxu0 0.0
      %780 = vmatprep.subr.mxu0 0.0
      %781 = vmatpush1.msra.mxu0 0.0
      %782 = vmatprep.subr.mxu0 0.0
      %783 = vmatpush1.msra.mxu0 0.0
      %784 = vmatprep.subr.mxu0 0.0
      %785 = vmatpush1.msra.mxu0 0.0
      %786 = vmatprep.subr.mxu0 0.0
      %787 = vmatpush1.msra.mxu0 0.0
      %788 = vmatprep.subr.mxu0 0.0
      %789 = vmatpush1.msra.mxu0 0.0
      %790 = vmatprep.subr.mxu0 0.0
      %791 = vmatpush1.msra.mxu0 0.0
      %792 = vmatprep.subr.mxu0 0.0
      %793 = vmatpush1.msra.mxu0 0.0
      %794 = vmatprep.subr.mxu0 0.0
      %795 = vmatpush1.msra.mxu0 0.0
      %796 = vmatprep.subr.mxu0 0.0
      %797 = vmatpush1.msra.mxu0 0.0
      %798 = vmatprep.subr.mxu0 0.0
      %799 = vmatpush1.msra.mxu0 0.0
      %800 = vmatprep.subr.mxu0 0.0
      %801 = vmatpush1.msra.mxu0 0.0
      %802 = vmatprep.subr.mxu0 0.0
      %803 = vmatpush1.msra.mxu0 0.0
      %804 = vmatprep.subr.mxu0 0.0
      %805 = vmatpush1.msra.mxu0 0.0
      %806 = vmatprep.subr.mxu0 0.0
      %807 = vmatpush1.msra.mxu0 0.0
      %808 = vmatprep.subr.mxu0 0.0
      %809 = vmatpush1.msra.mxu0 0.0
      %810 = vmatprep.subr.mxu0 0.0
      %811 = vmatpush1.msra.mxu0 0.0
      %812 = vmatprep.subr.mxu0 0.0
      %813 = vmatpush1.msra.mxu0 0.0
      %814 = vmatprep.mubr.f32.mxu0 0.0
      %815 = vmatmul.mubr.f32.gmra.mrb[0].mxu0 %v703
      %v816 = vpop.f32.mrb[0].mxu0
      %v817 = vadd.f32 %v668, %v816
      %v818 = vpop.f32.mrb[0].mxu0
      %819 = vmatprep.mubr.f32.mxu0 0.0
      %820 = vmatmul.mubr.f32.gmra.mrb[0].mxu0 %v706
      %v821 = vpop.f32.mrb[0].mxu0
      %v822 = vadd.f32 %v668, %v821
      %v823 = vpop.f32.mrb[0].mxu0
      %824 = vmatprep.mubr.f32.mxu0 0.0
      %825 = vmatmul.mubr.f32.gmra.mrb[0].mxu0 %v709
      %v826 = vpop.f32.mrb[0].mxu0
      %v827 = vadd.f32 %v668, %v826
      %v828 = vpop.f32.mrb[0].mxu0
      %829 = vmatprep.mubr.f32.mxu0 0.0
      %830 = vmatmul.mubr.f32.gmra.mrb[0].mxu0 %v712
      %v831 = vpop.f32.mrb[0].mxu0
      %v832 = vadd.f32 %v668, %v831
      %v833 = vpop.f32.mrb[0].mxu0
      %834 = vmatprep.mubr.f32.mxu0 0.0
      %835 = vmatmul.mubr.f32.gmra.mrb[0].mxu0 %v715
      %v836 = vpop.f32.mrb[0].mxu0
      %v837 = vadd.f32 %v668, %v836
      %v838 = vpop.f32.mrb[0].mxu0
      %839 = vmatprep.mubr.f32.mxu0 0.0
      %840 = vmatmul.mubr.f32.gmra.mrb[0].mxu0 %v718
      %v841 = vpop.f32.mrb[0].mxu0
      %v842 = vadd.f32 %v668, %v841
      %v843 = vpop.f32.mrb[0].mxu0
      %844 = vmatprep.mubr.f32.mxu0 0.0
      %845 = vmatmul.mubr.f32.gmra.mrb[0].mxu0 %v721
      %v846 = vpop.f32.mrb[0].mxu0
      %v847 = vadd.f32 %v668, %v846
      %v848 = vpop.f32.mrb[0].mxu0
      %849 = vmatprep.mubr.f32.mxu0 0.0
      %850 = vmatmul.mubr.f32.gmra.mrb[0].mxu0 %v724
      %v851 = vpop.f32.mrb[0].mxu0
      %v852 = vadd.f32 %v668, %v851
      %v853 = vpop.f32.mrb[0].mxu0
      %854 = vmatprep.mubr.f32.mxu0 0.0
      %855 = vmatmul.mubr.f32.gmra.mrb[0].mxu0 %v727
      %v856 = vpop.f32.mrb[0].mxu0
      %v857 = vadd.f32 %v668, %v856
      %v858 = vpop.f32.mrb[0].mxu0
      %859 = vmatprep.mubr.f32.mxu0 0.0
      %860 = vmatmul.mubr.f32.gmra.mrb[0].mxu0 %v730
      %v861 = vpop.f32.mrb[0].mxu0
      %v862 = vadd.f32 %v668, %v861
      %v863 = vpop.f32.mrb[0].mxu0
      %864 = vmatprep.mubr.f32.mxu0 0.0
      %865 = vmatmul.mubr.f32.gmra.mrb[0].mxu0 %v733
      %v866 = vpop.f32.mrb[0].mxu0
      %v867 = vadd.f32 %v668, %v866
      %v868 = vpop.f32.mrb[0].mxu0
      %869 = vmatprep.mubr.f32.mxu0 0.0
      %870 = vmatmul.mubr.f32.gmra.mrb[0].mxu0 %v736
      %v871 = vpop.f32.mrb[0].mxu0
      %v872 = vadd.f32 %v668, %v871
      %v873 = vpop.f32.mrb[0].mxu0
      %874 = vmatprep.mubr.f32.mxu0 0.0
      %875 = vmatmul.mubr.f32.gmra.mrb[0].mxu0 %v739
      %v876 = vpop.f32.mrb[0].mxu0
      %v877 = vadd.f32 %v668, %v876
      %v878 = vpop.f32.mrb[0].mxu0
      %879 = vmatprep.mubr.f32.mxu0 0.0
      %880 = vmatmul.mubr.f32.gmra.mrb[0].mxu0 %v742
      %v881 = vpop.f32.mrb[0].mxu0
      %v882 = vadd.f32 %v668, %v881
      %v883 = vpop.f32.mrb[0].mxu0
      %884 = vmatprep.mubr.f32.mxu0 0.0
      %885 = vmatmul.mubr.f32.gmra.mrb[0].mxu0 %v745
      %v886 = vpop.f32.mrb[0].mxu0
      %v887 = vadd.f32 %v668, %v886
      %v888 = vpop.f32.mrb[0].mxu0
      %889 = vmatprep.mubr.f32.mxu0 0.0
      %890 = vmatmul.mubr.f32.gmra.mrb[0].mxu0 %v748
      %v891 = vpop.f32.mrb[0].mxu0
      %v892 = vadd.f32 %v668, %v891
      %v893 = vpop.f32.mrb[0].mxu0
      %894 = vdwg.mxu0
      %895 = vst.msk [vmem:[%s199] sm:$0xff] %vm245, %v817
      %896 = vst.msk [vmem:[%s199 + $0x8] sm:$0xff] %vm245, %v822
      %897 = vst.msk [vmem:[%s199 + $0x10] sm:$0xff] %vm245, %v827
      %898 = vst.msk [vmem:[%s199 + $0x18] sm:$0xff] %vm245, %v832
      %899 = vst.msk [vmem:[%s199 + $0x20] sm:$0xff] %vm245, %v837
      %900 = vst.msk [vmem:[%s199 + $0x28] sm:$0xff] %vm245, %v842
      %901 = vst.msk [vmem:[%s199 + $0x30] sm:$0xff] %vm245, %v847
      %902 = vst.msk [vmem:[%s199 + $0x38] sm:$0xff] %vm245, %v852
      %903 = vst.msk [vmem:[%s199 + $0x40] sm:$0xff] %vm245, %v857
      %904 = vst.msk [vmem:[%s199 + $0x48] sm:$0xff] %vm245, %v862
      %905 = vst.msk [vmem:[%s199 + $0x50] sm:$0xff] %vm245, %v867
      %906 = vst.msk [vmem:[%s199 + $0x58] sm:$0xff] %vm245, %v872
      %907 = vst.msk [vmem:[%s199 + $0x60] sm:$0xff] %vm245, %v877
      %908 = vst.msk [vmem:[%s199 + $0x68] sm:$0xff] %vm245, %v882
      %909 = vst.msk [vmem:[%s199 + $0x70] sm:$0xff] %vm245, %v887
      %910 = vst.msk [vmem:[%s199 + $0x78] sm:$0xff] %vm245, %v892
      %s911 = smul.u32 16, %s15
      %p912 = scmp.lt.s32.totalorder %s911, 31
      %s913 = scalar_select %p912, %s911, 31
      %s914 = smul.addr %s913, 8
      %s915 = scalar_lea.vmem %s4, %s914
      // Predicated region
      $region37: #{decoder_forward.1} parent=35 // pred_check
        %p916 = pneg %p122
      $region38: #{decoder_forward.1} parent=35 // pred_check_branch
        %918 = sbr.rel (%p916) target = $region40
      $region39: #{decoder_forward.1} parent=35 // pred_region
        %s919 = smul.u32 16, %s15
      $region40: #{decoder_forward.1} parent=35 // pred_fallthru
        _
    $region36: #{decoder_forward.1} parent=5 // pred_fallthru
      _
    %p920 = scmp.le.s32.totalorder 2, %s10
    // Predicated region
    $region41: #{decoder_forward.1} parent=5 // pred_check
      %p921 = pneg %p920
    $region42: #{decoder_forward.1} parent=5 // pred_check_branch
      %923 = sbr.rel (%p921) target = $region44
    $region43: #{decoder_forward.1} parent=5 // pred_region
      %s924 = ssub.s32 %s10, 2
      // Predicated region
      $region45: #{decoder_forward.1} parent=43 // pred_check
        %p925 = pneg %p128
      $region46: #{decoder_forward.1} parent=43 // pred_check_branch
        %927 = sbr.rel (%p925) target = $region48
      $region47: #{decoder_forward.1} parent=43 // pred_region
        %s928 = smul.u32 16, %s16
        %p929 = scmp.lt.s32.totalorder %s928, 31
        %s930 = scalar_select %p929, %s928, 31
        %s931 = smul.addr %s930, 8
        %s932 = scalar_lea.vmem %s4, %s931
      $region48: #{decoder_forward.1} parent=43 // pred_fallthru
        _
    $region44: #{decoder_forward.1} parent=5 // pred_fallthru
      _
  $region6: #{decoder_forward.1} parent=0 // loop_footer
    %s14 = sadd.s32 1, %s10
  $region7: #{decoder_forward.1} parent=0 // loop_footer_branch
    %9 = sbr.rel target = $region3
  $region8: #{decoder_forward.1} parent=0 // loop_exit
    _

</llo_original>
